<compile_context>
chip_gen: v7x
topology: tpu7x:2x2x1
jax: 0.10.0
libtpu: 0.0.40
codegen_flags: <defaults>
</compile_context>

<pallas_src>
import jax
import jax.numpy as jnp
from jax.experimental import pallas as pl
from jax.experimental.pallas import tpu as pltpu

LANE = 128


# ----------------------------------------------------------------------------
# Parameter init: angle-axis -> rotation matrix (Rodrigues formula), matching
# kornia/torchgeometry's angle_axis_to_rotation_matrix semantics.
# (Plain JAX outside the kernel; not a kernel-perf concern.)
# ----------------------------------------------------------------------------
def angle_axis_to_rotation_matrix(angle_axis: jnp.ndarray) -> jnp.ndarray:
    """angle_axis: (F, 3) -> (F, 3, 3) rotation matrices."""
    theta = jnp.linalg.norm(angle_axis, axis=-1, keepdims=True)          # (F, 1)
    small = theta < 1e-6
    safe_theta = jnp.where(small, jnp.ones_like(theta), theta)
    k = angle_axis / safe_theta                                          # unit axis
    kx, ky, kz = k[..., 0], k[..., 1], k[..., 2]
    zero = jnp.zeros_like(kx)
    K = jnp.stack(
        [
            jnp.stack([zero, -kz, ky], axis=-1),
            jnp.stack([kz, zero, -kx], axis=-1),
            jnp.stack([-ky, kx, zero], axis=-1),
        ],
        axis=-2,
    )                                                                    # (F, 3, 3)
    eye = jnp.eye(3, dtype=angle_axis.dtype)
    st = jnp.sin(theta)[..., None]                                       # (F, 1, 1)
    ct = jnp.cos(theta)[..., None]
    R_full = eye + st * K + (1.0 - ct) * (K @ K)
    # First-order fallback for ~zero rotation: I + skew(angle_axis)
    ax, ay, az = angle_axis[..., 0], angle_axis[..., 1], angle_axis[..., 2]
    K_raw = jnp.stack(
        [
            jnp.stack([zero, -az, ay], axis=-1),
            jnp.stack([az, zero, -ax], axis=-1),
            jnp.stack([-ay, ax, zero], axis=-1),
        ],
        axis=-2,
    )
    R_small = eye + K_raw
    return jnp.where(small[..., None], R_small, R_full)


def make_rigid_weights(num_frames: int, seed: int = 0) -> jnp.ndarray:
    """Deterministic stand-in for the torch.manual_seed(r) uniform init."""
    # TODO(synk): not bit-identical to torch's RNG stream; same distribution.
    key = jax.random.PRNGKey(seed)
    angles = jax.random.uniform(
        key, (num_frames, 3), minval=-0.3, maxval=0.3, dtype=jnp.float32
    )
    return angle_axis_to_rotation_matrix(angles)                         # (F, 3, 3)


# ----------------------------------------------------------------------------
# Pallas kernel: y[d, f, n] = sum_c x[c, f, n] * W[f, c, d]   (pure VPU FMAs)
# ----------------------------------------------------------------------------
def _rigid_kernel(w_ref, x_ref, o_ref):
    # w_ref: (3, 3, F, 1) f32   x_ref / o_ref: (3, F, TILE_N) in the I/O dtype.
    w = w_ref[...]                       # tiny block, loaded once per grid step
    x0 = x_ref[0].astype(jnp.float32)    # (F, TILE_N)
    x1 = x_ref[1].astype(jnp.float32)
    x2 = x_ref[2].astype(jnp.float32)
    for d in range(3):                   # static unroll: 9 broadcast-FMAs total
        y_d = x0 * w[0, d] + x1 * w[1, d] + x2 * w[2, d]
        o_ref[d] = y_d.astype(o_ref.dtype)


def _round_up(n: int, m: int) -> int:
    return ((n + m - 1) // m) * m


def _pick_tile(num_frames: int, n_padded: int) -> int:
    """Largest lane tile whose double-buffered in+out blocks fit the budget."""
    # Pallas double-buffers the (3, F, tile) input and output blocks; budget
    # all four buffers (worst case f32) at <= 16 MiB so the kernel stays well
    # inside the 32 MiB scoped-VMEM request on every TPU generation.
    budget = 16 * 1024 * 1024
    per_lane = 4 * 3 * num_frames * 4          # 4 buffers * 3 rows-of-F * f32
    cap = max(LANE, (budget // per_lane) // LANE * LANE)
    cap = min(cap, 32768)                      # wider tiles give no extra gain
    return min(cap, n_padded)


@jax.jit
def rigid_transform_forward(x: jnp.ndarray, weights: jnp.ndarray) -> jnp.ndarray:
    """x: (B, F, J, 3), weights: (F, 3, 3) -> (B, F, J, 3)."""
    B, F, J, C = x.shape
    assert C == 3 and weights.shape == (F, 3, 3)
    N = B * J

    # Lane-dense relayout: points on the lane (last) axis -> (3, F, N).
    xT = jnp.transpose(x, (3, 1, 0, 2)).reshape(C, F, N)

    tile = _pick_tile(F, _round_up(N, LANE))
    Np = _round_up(N, tile)
    if Np != N:
        xT = jnp.pad(xT, ((0, 0), (0, 0), (0, Np - N)))

    # Weight columns: wcols[c, d, f, 0] = W[f, c, d]  (tiny; fetched once thanks
    # to the constant index_map).
    wcols = jnp.transpose(weights.astype(jnp.float32), (1, 2, 0))[..., None]

    itemsize = jnp.dtype(x.dtype).itemsize
    flops = 2 * 3 * 3 * N * F                       # 9 MACs per point per frame
    bytes_accessed = 2 * C * F * Np * itemsize + wcols.size * 4

    yT = pl.pallas_call(
        _rigid_kernel,
        out_shape=jax.ShapeDtypeStruct((C, F, Np), x.dtype),
        grid=(Np // tile,),
        in_specs=[
            pl.BlockSpec((C, C, F, 1), lambda i: (0, 0, 0, 0)),
            pl.BlockSpec((C, F, tile), lambda i: (0, 0, i)),
        ],
        out_specs=pl.BlockSpec((C, F, tile), lambda i: (0, 0, i)),
        compiler_params=pltpu.CompilerParams(
            dimension_semantics=("parallel",),      # v7x: split points over 2 TCs
            vmem_limit_bytes=32 * 1024 * 1024,
        ),
        cost_estimate=pl.CostEstimate(
            flops=flops, transcendentals=0, bytes_accessed=bytes_accessed
        ),
    )(wcols, xT)

    # Undo padding + relayout back to the module's (B, F, J, 3) contract.
    y = yT[:, :, :N].reshape(C, F, B, J)
    return jnp.transpose(y, (2, 1, 3, 0))


if __name__ == "__main__":
    # Small shapes consistent with the module: batch=2, frames=8, joints=16, coords=3.
    B, F, J = 2, 8, 16

    weights = make_rigid_weights(F, seed=0)                              # (F, 3, 3)

    key = jax.random.PRNGKey(0)
    x = jax.random.normal(key, (B, F, J, 3), dtype=jnp.float32)

    y = rigid_transform_forward(x, weights)
    y = jax.block_until_ready(y)

    # Reference: torch.matmul(x, weights) with broadcasting over batch.
    y_ref = jnp.einsum("bfjc,fcd->bfjd", x, weights)

    assert y.shape == (B, F, J, 3), y.shape
    assert jnp.allclose(y, y_ref, atol=1e-5, rtol=1e-5), "mismatch vs reference"

    print("KERNEL_OK")
</pallas_src>

<mosaic_0001>
module attributes {stable_mosaic.version = 11 : i64} {
  func.func @_rigid_kernel(%arg0: i32, %arg1: memref<3x3x8x1xf32, #tpu.memory_space<vmem>>, %arg2: memref<3x8x128xf32, #tpu.memory_space<vmem>>, %arg3: memref<3x8x128xf32, #tpu.memory_space<vmem>>) attributes {dimension_semantics = [#tpu.dimension_semantics<parallel>], iteration_bounds = array<i64: 1>, scalar_prefetch = 0 : i64, scratch_operands = 0 : i64, tpu.core_type = #tpu.core_type<tc>, window_params = [{pipeline_mode = #tpu.pipeline_mode<synchronous>, transform_indices = @transform_0, window_bounds = array<i64: 3, 3, 8, 1>}, {transform_indices = @transform_1, window_bounds = array<i64: 3, 8, 128>}, {transform_indices = @transform_2, window_bounds = array<i64: 3, 8, 128>}]} {
    %c0 = arith.constant 0 : index
    %c0_0 = arith.constant 0 : index
    %c0_1 = arith.constant 0 : index
    %c0_2 = arith.constant 0 : index
    %0 = vector.load %arg1[%c0, %c0_0, %c0_1, %c0_2] : memref<3x3x8x1xf32, #tpu.memory_space<vmem>>, vector<3x3x8x1xf32>
    %c0_3 = arith.constant 0 : index
    %c0_4 = arith.constant 0 : index
    %c0_5 = arith.constant 0 : index
    %1 = vector.load %arg2[%c0_3, %c0_4, %c0_5] : memref<3x8x128xf32, #tpu.memory_space<vmem>>, vector<1x8x128xf32>
    %2 = vector.shape_cast %1 : vector<1x8x128xf32> to vector<8x128xf32>
    %c1 = arith.constant 1 : index
    %c0_6 = arith.constant 0 : index
    %c0_7 = arith.constant 0 : index
    %3 = vector.load %arg2[%c1, %c0_6, %c0_7] : memref<3x8x128xf32, #tpu.memory_space<vmem>>, vector<1x8x128xf32>
    %4 = vector.shape_cast %3 : vector<1x8x128xf32> to vector<8x128xf32>
    %c2 = arith.constant 2 : index
    %c0_8 = arith.constant 0 : index
    %c0_9 = arith.constant 0 : index
    %5 = vector.load %arg2[%c2, %c0_8, %c0_9] : memref<3x8x128xf32, #tpu.memory_space<vmem>>, vector<1x8x128xf32>
    %6 = vector.shape_cast %5 : vector<1x8x128xf32> to vector<8x128xf32>
    %7 = vector.extract_strided_slice %0 {offsets = [0, 0, 0, 0], sizes = [1, 1, 8, 1], strides = [1, 1, 1, 1]} : vector<3x3x8x1xf32> to vector<1x1x8x1xf32>
    %8 = vector.shape_cast %7 : vector<1x1x8x1xf32> to vector<8x1xf32>
    %9 = vector.broadcast %8 : vector<8x1xf32> to vector<8x128xf32>
    %10 = arith.mulf %2, %9 : vector<8x128xf32>
    %11 = vector.extract_strided_slice %0 {offsets = [1, 0, 0, 0], sizes = [1, 1, 8, 1], strides = [1, 1, 1, 1]} : vector<3x3x8x1xf32> to vector<1x1x8x1xf32>
    %12 = vector.shape_cast %11 : vector<1x1x8x1xf32> to vector<8x1xf32>
    %13 = vector.broadcast %12 : vector<8x1xf32> to vector<8x128xf32>
    %14 = arith.mulf %4, %13 : vector<8x128xf32>
    %15 = arith.addf %10, %14 : vector<8x128xf32>
    %16 = vector.extract_strided_slice %0 {offsets = [2, 0, 0, 0], sizes = [1, 1, 8, 1], strides = [1, 1, 1, 1]} : vector<3x3x8x1xf32> to vector<1x1x8x1xf32>
    %17 = vector.shape_cast %16 : vector<1x1x8x1xf32> to vector<8x1xf32>
    %18 = vector.broadcast %17 : vector<8x1xf32> to vector<8x128xf32>
    %19 = arith.mulf %6, %18 : vector<8x128xf32>
    %20 = arith.addf %15, %19 : vector<8x128xf32>
    %c0_10 = arith.constant 0 : index
    %c0_11 = arith.constant 0 : index
    %c0_12 = arith.constant 0 : index
    %21 = vector.load %arg3[%c0_10, %c0_11, %c0_12] : memref<3x8x128xf32, #tpu.memory_space<vmem>>, vector<1x8x128xf32>
    %22 = vector.shape_cast %21 : vector<1x8x128xf32> to vector<8x128xf32>
    %23 = vector.shape_cast %20 : vector<8x128xf32> to vector<1x8x128xf32>
    tpu.vector_store %arg3[%c0_10, %c0_11, %c0_12], %23 {strides = array<i32>} : memref<3x8x128xf32, #tpu.memory_space<vmem>>, vector<1x8x128xf32>,
    %24 = vector.extract_strided_slice %0 {offsets = [0, 1, 0, 0], sizes = [1, 1, 8, 1], strides = [1, 1, 1, 1]} : vector<3x3x8x1xf32> to vector<1x1x8x1xf32>
    %25 = vector.shape_cast %24 : vector<1x1x8x1xf32> to vector<8x1xf32>
    %26 = vector.broadcast %25 : vector<8x1xf32> to vector<8x128xf32>
    %27 = arith.mulf %2, %26 : vector<8x128xf32>
    %28 = vector.extract_strided_slice %0 {offsets = [1, 1, 0, 0], sizes = [1, 1, 8, 1], strides = [1, 1, 1, 1]} : vector<3x3x8x1xf32> to vector<1x1x8x1xf32>
    %29 = vector.shape_cast %28 : vector<1x1x8x1xf32> to vector<8x1xf32>
    %30 = vector.broadcast %29 : vector<8x1xf32> to vector<8x128xf32>
    %31 = arith.mulf %4, %30 : vector<8x128xf32>
    %32 = arith.addf %27, %31 : vector<8x128xf32>
    %33 = vector.extract_strided_slice %0 {offsets = [2, 1, 0, 0], sizes = [1, 1, 8, 1], strides = [1, 1, 1, 1]} : vector<3x3x8x1xf32> to vector<1x1x8x1xf32>
    %34 = vector.shape_cast %33 : vector<1x1x8x1xf32> to vector<8x1xf32>
    %35 = vector.broadcast %34 : vector<8x1xf32> to vector<8x128xf32>
    %36 = arith.mulf %6, %35 : vector<8x128xf32>
    %37 = arith.addf %32, %36 : vector<8x128xf32>
    %c1_13 = arith.constant 1 : index
    %c0_14 = arith.constant 0 : index
    %c0_15 = arith.constant 0 : index
    %38 = vector.load %arg3[%c1_13, %c0_14, %c0_15] : memref<3x8x128xf32, #tpu.memory_space<vmem>>, vector<1x8x128xf32>
    %39 = vector.shape_cast %38 : vector<1x8x128xf32> to vector<8x128xf32>
    %40 = vector.shape_cast %37 : vector<8x128xf32> to vector<1x8x128xf32>
    tpu.vector_store %arg3[%c1_13, %c0_14, %c0_15], %40 {strides = array<i32>} : memref<3x8x128xf32, #tpu.memory_space<vmem>>, vector<1x8x128xf32>,
    %41 = vector.extract_strided_slice %0 {offsets = [0, 2, 0, 0], sizes = [1, 1, 8, 1], strides = [1, 1, 1, 1]} : vector<3x3x8x1xf32> to vector<1x1x8x1xf32>
    %42 = vector.shape_cast %41 : vector<1x1x8x1xf32> to vector<8x1xf32>
    %43 = vector.broadcast %42 : vector<8x1xf32> to vector<8x128xf32>
    %44 = arith.mulf %2, %43 : vector<8x128xf32>
    %45 = vector.extract_strided_slice %0 {offsets = [1, 2, 0, 0], sizes = [1, 1, 8, 1], strides = [1, 1, 1, 1]} : vector<3x3x8x1xf32> to vector<1x1x8x1xf32>
    %46 = vector.shape_cast %45 : vector<1x1x8x1xf32> to vector<8x1xf32>
    %47 = vector.broadcast %46 : vector<8x1xf32> to vector<8x128xf32>
    %48 = arith.mulf %4, %47 : vector<8x128xf32>
    %49 = arith.addf %44, %48 : vector<8x128xf32>
    %50 = vector.extract_strided_slice %0 {offsets = [2, 2, 0, 0], sizes = [1, 1, 8, 1], strides = [1, 1, 1, 1]} : vector<3x3x8x1xf32> to vector<1x1x8x1xf32>
    %51 = vector.shape_cast %50 : vector<1x1x8x1xf32> to vector<8x1xf32>
    %52 = vector.broadcast %51 : vector<8x1xf32> to vector<8x128xf32>
    %53 = arith.mulf %6, %52 : vector<8x128xf32>
    %54 = arith.addf %49, %53 : vector<8x128xf32>
    %c2_16 = arith.constant 2 : index
    %c0_17 = arith.constant 0 : index
    %c0_18 = arith.constant 0 : index
    %55 = vector.load %arg3[%c2_16, %c0_17, %c0_18] : memref<3x8x128xf32, #tpu.memory_space<vmem>>, vector<1x8x128xf32>
    %56 = vector.shape_cast %55 : vector<1x8x128xf32> to vector<8x128xf32>
    %57 = vector.shape_cast %54 : vector<8x128xf32> to vector<1x8x128xf32>
    tpu.vector_store %arg3[%c2_16, %c0_17, %c0_18], %57 {strides = array<i32>} : memref<3x8x128xf32, #tpu.memory_space<vmem>>, vector<1x8x128xf32>,
    return
  }
  func.func @transform_0(%arg0: i32) -> (i32, i32, i32, i32) {
    %c0_i32 = arith.constant 0 : i32
    %c0_i32_0 = arith.constant 0 : i32
    %c0_i32_1 = arith.constant 0 : i32
    %c0_i32_2 = arith.constant 0 : i32
    %c0_i32_3 = arith.constant 0 : i32
    return %c0_i32, %c0_i32_0, %c0_i32_1, %c0_i32_2 : i32, i32, i32, i32
  }
  func.func @transform_1(%arg0: i32) -> (i32, i32, i32) {
    %c0_i32 = arith.constant 0 : i32
    %c0_i32_0 = arith.constant 0 : i32
    %c0_i32_1 = arith.constant 0 : i32
    return %c0_i32, %c0_i32_0, %arg0 : i32, i32, i32
  }
  func.func @transform_2(%arg0: i32) -> (i32, i32, i32) {
    %c0_i32 = arith.constant 0 : i32
    %c0_i32_0 = arith.constant 0 : i32
    %c0_i32_1 = arith.constant 0 : i32
    return %c0_i32, %c0_i32_0, %arg0 : i32, i32, i32
  }
}

</mosaic_0001>

<llo_original>
// kernel: rigid_transform_forward.1
$region0: #{rigid_transform_forward.1}
  #allocation0 [shape = 'u32[]', space=smem, size = 0x4, offset = 0x4, fixed_abs, tag = 'smem constant byte address 0x4 - core index']
  #allocation1 [shape = 'u32[144,128]{1,0:T(1,128)}', space=vmem, size = 0x12000, scoped, tag = 'internal scratch']
  %s0 = inlined_call_operand.vmem [shape: f32[3,3,8,1], index: 0, kind: input, shape index: {}]
  %s1 = inlined_call_operand.vmem [shape: f32[3,8,128], index: 1, kind: input, shape index: {}]
  %s2 = inlined_call_operand.vmem [shape: f32[3,8,128], index: 2, kind: output, shape index: {}]
  %s3 = sld [smem:[#allocation0]]
  $region18: #{rigid_transform_forward.1} parent=0
    _
  %s5 = ssub.s32 1, %s3
  %s6 = scalar_select 0, %s5, %s3
  // Predicated region
  $region2: #{rigid_transform_forward.1} parent=0 // pred_check
    _
  $region3: #{rigid_transform_forward.1} parent=0 // pred_check_branch
    %8 = sbr.rel (0) target = $region5
  $region4: #{rigid_transform_forward.1} parent=0 // pred_region
    _
  $region5: #{rigid_transform_forward.1} parent=0 // pred_fallthru
    _
  // Predicated region
  $region6: #{rigid_transform_forward.1} parent=0 // pred_check
    _
  $region7: #{rigid_transform_forward.1} parent=0 // pred_check_branch
    %10 = sbr.rel (0) target = $region9
  $region8: #{rigid_transform_forward.1} parent=0 // pred_region
    _
  $region9: #{rigid_transform_forward.1} parent=0 // pred_fallthru
    _
  %v11 = vld [vmem:[%s0] sm:$0xff]
  %v12 = vld [vmem:[%s0 + $0x8] sm:$0xff]
  %v13 = vld [vmem:[%s0 + $0x10] sm:$0xff]
  %v14 = vld [vmem:[%s0 + $0x18] sm:$0xff]
  %v15 = vld [vmem:[%s0 + $0x20] sm:$0xff]
  %v16 = vld [vmem:[%s0 + $0x28] sm:$0xff]
  %v17 = vld [vmem:[%s0 + $0x30] sm:$0xff]
  %v18 = vld [vmem:[%s0 + $0x38] sm:$0xff]
  %v19 = vld [vmem:[%s0 + $0x40] sm:$0xff]
  %v20 = vld [vmem:[%s1] sm:$0xff]
  %s21 = scalar_lea.vmem %s1, 8
  %v22 = vld [vmem:[%s21] sm:$0xff]
  %s23 = scalar_lea.vmem %s1, 16
  %v24 = vld [vmem:[%s23] sm:$0xff]
  %26 = vset.pattern.permute.xlu0 0
  %27 = vperm.xlu0 %26, %v11
  %v28 = vpop.permute.xlu0 %27
  %v30 = vmul.f32 %v20, %v28
  %32 = vset.pattern.permute.xlu0 0
  %33 = vperm.xlu0 %32, %v14
  %v34 = vpop.permute.xlu0 %33
  %v36 = vmul.f32 %v22, %v34
  %v37 = vadd.f32 %v30, %v36
  %39 = vset.pattern.permute.xlu0 0
  %40 = vperm.xlu0 %39, %v17
  %v41 = vpop.permute.xlu0 %40
  %v43 = vmul.f32 %v24, %v41
  %v44 = vadd.f32 %v37, %v43
  %45 = vst [vmem:[%s2] sm:$0xff] %v44
  %47 = vset.pattern.permute.xlu0 0
  %48 = vperm.xlu0 %47, %v12
  %v49 = vpop.permute.xlu0 %48
  %v51 = vmul.f32 %v20, %v49
  %53 = vset.pattern.permute.xlu0 0
  %54 = vperm.xlu0 %53, %v15
  %v55 = vpop.permute.xlu0 %54
  %v57 = vmul.f32 %v22, %v55
  %v58 = vadd.f32 %v51, %v57
  %60 = vset.pattern.permute.xlu0 0
  %61 = vperm.xlu0 %60, %v18
  %v62 = vpop.permute.xlu0 %61
  %v64 = vmul.f32 %v24, %v62
  %v65 = vadd.f32 %v58, %v64
  %s66 = scalar_lea.vmem %s2, 8
  %67 = vst [vmem:[%s66] sm:$0xff] %v65
  %69 = vset.pattern.permute.xlu0 0
  %70 = vperm.xlu0 %69, %v13
  %v71 = vpop.permute.xlu0 %70
  %v73 = vmul.f32 %v20, %v71
  %75 = vset.pattern.permute.xlu0 0
  %76 = vperm.xlu0 %75, %v16
  %v77 = vpop.permute.xlu0 %76
  %v79 = vmul.f32 %v22, %v77
  %v80 = vadd.f32 %v73, %v79
  %82 = vset.pattern.permute.xlu0 0
  %83 = vperm.xlu0 %82, %v19
  %v84 = vpop.permute.xlu0 %83
  %v86 = vmul.f32 %v24, %v84
  %v87 = vadd.f32 %v80, %v86
  %s88 = scalar_lea.vmem %s2, 16
  %89 = vst [vmem:[%s88] sm:$0xff] %v87
  // Predicated region
  $region10: #{rigid_transform_forward.1} parent=0 // pred_check
    _
  $region11: #{rigid_transform_forward.1} parent=0 // pred_check_branch
    %91 = sbr.rel (0) target = $region13
  $region12: #{rigid_transform_forward.1} parent=0 // pred_region
    _
  $region13: #{rigid_transform_forward.1} parent=0 // pred_fallthru
    _
  // Predicated region
  $region14: #{rigid_transform_forward.1} parent=0 // pred_check
    _
  $region15: #{rigid_transform_forward.1} parent=0 // pred_check_branch
    %93 = sbr.rel (0) target = $region17
  $region16: #{rigid_transform_forward.1} parent=0 // pred_region
    _
  $region17: #{rigid_transform_forward.1} parent=0 // pred_fallthru
    _

</llo_original>
